<compile_context>
chip_gen: v7x
topology: tpu7x:2x2x1
jax: 0.10.0
libtpu: 0.0.40
codegen_flags: <defaults>
</compile_context>

<pallas_src>
import jax
import jax.numpy as jnp
from jax.experimental import pallas as pl
from jax.experimental.pallas import tpu as pltpu


# ----------------------------------------------------------------------------
# Hardware-aware knobs
# ----------------------------------------------------------------------------
def _tpu_params():
    """Return (vmem_capacity_bytes, native_bf16_valu) with safe fallbacks."""
    try:
        kind = jax.devices()[0].device_kind.lower()
    except Exception:
        kind = ""
    vmem_cap = None
    try:
        vmem_cap = int(pltpu.get_tpu_info().vmem_capacity_bytes)
    except Exception:
        vmem_cap = None
    if vmem_cap is None:
        vmem_cap = (64 << 20) if "v7" in kind else (128 << 20)
    # v6e/v7x VPUs are bf16-native; v2-v5 are not (keep the f32 multiply there).
    native_bf16 = not any(g in kind for g in ("v2", "v3", "v4", "v5"))
    return vmem_cap, native_bf16


def _choose_tile(total_lanes, sublanes, itemsize, budget_bytes, override=None):
    """Pick a lane tile: either full extent (always layout-legal) or a multiple
    of 128 that keeps one (sublanes, tile) block within budget_bytes."""
    if override is not None:
        cand = int(override)
    else:
        max_lanes = max(
            128, ((budget_bytes // max(1, sublanes * itemsize)) // 128) * 128)
        cand = max_lanes
    if cand >= total_lanes:
        return int(total_lanes), 1          # single full-extent block
    tile = max(128, (cand // 128) * 128)    # ragged edge handled via cdiv grid
    return int(tile), int(pl.cdiv(total_lanes, tile))


# ----------------------------------------------------------------------------
# Stage 1: tiny channel-attention MLP (whole batch in one invocation)
# ----------------------------------------------------------------------------
def _attn_mlp_kernel(label_ref, w1_ref, w2_ref, attn_ref, gate_ref):
    lab = label_ref[...].astype(jnp.float32)                     # (B, C1)
    w1 = w1_ref[...].astype(jnp.float32)                         # (C1, C0)
    w2 = w2_ref[...].astype(jnp.float32)                         # (C0, C0)
    h = jnp.maximum(jnp.dot(lab, w1, preferred_element_type=jnp.float32), 0.0)
    attn = jnp.dot(h, w2, preferred_element_type=jnp.float32)    # (B, C0)
    attn_ref[...] = attn.astype(attn_ref.dtype)
    gate_ref[...] = (1.0 / (1.0 + jnp.exp(-attn))).astype(gate_ref.dtype)


# ----------------------------------------------------------------------------
# Stage 2: stream the feature map and apply the per-channel gate (VPU multiply)
# ----------------------------------------------------------------------------
def _make_gate_mul_kernel(compute_dtype):
    def kernel(gate_ref, feats_ref, out_ref):
        x = feats_ref[...].astype(compute_dtype)
        g = gate_ref[...].astype(compute_dtype)   # broadcasts along lanes
        out_ref[...] = (x * g).astype(out_ref.dtype)
    return kernel


# ----------------------------------------------------------------------------
# Wrapper
# ----------------------------------------------------------------------------
def label_attention_pallas(feats, label, w1, w2, *, s_tile=None):
    """feats: (B, C0, H, W); label: (B, C1); w1: (C1, C0); w2: (C0, C0).

    w1/w2 are the 1x1-conv weights stored transposed as (in, out).
    Returns (ch_attn (B, C0) f32, gated_feats (B, C0, H, W))."""
    B, C0, H, W = feats.shape
    Bl, C1 = label.shape
    assert Bl == B and w1.shape == (C1, C0) and w2.shape == (C0, C0)
    HW = H * W
    itemsize = feats.dtype.itemsize

    vmem_cap, native_bf16 = _tpu_params()
    budget_bytes = max(2 << 20, vmem_cap // 16)   # per streamed block

    if feats.dtype == jnp.bfloat16 and native_bf16:
        compute_dtype = jnp.bfloat16               # bf16-native gating (v6e/v7x)
    else:
        compute_dtype = jnp.float32

    # ---- Stage 1: MLP + sigmoid, whole batch, single kernel invocation ----
    attn, gate = pl.pallas_call(
        _attn_mlp_kernel,
        out_shape=(
            jax.ShapeDtypeStruct((B, C0), jnp.float32),
            jax.ShapeDtypeStruct((B, C0), compute_dtype),
        ),
    )(label, w1, w2)

    # ---- Stage 2: choose a lane-dense streaming layout ----
    if HW >= 128:
        # Channels on sublanes, spatial on lanes; gate resident in same layout.
        total_lanes, sublanes = HW, C0
        x = feats.reshape(B, C0, HW)
        gate_in = gate.reshape(B, C0, 1)
        tile, n_s = _choose_tile(total_lanes, sublanes, itemsize,
                                 budget_bytes, override=s_tile)
        blk_shape = (1, C0, tile)
        gate_spec = pl.BlockSpec((1, C0, 1), lambda b, s: (b, 0, 0))
        out_shape2 = jax.ShapeDtypeStruct((B, C0, HW), feats.dtype)
    else:
        # Small spatial maps: flatten so stores stay lane-dense (>=128 lanes);
        # gate is pre-broadcast along lanes (channel value repeated HW times).
        L = C0 * HW
        total_lanes, sublanes = L, 1
        x = feats.reshape(B, 1, L)
        gate_in = jnp.repeat(gate, HW, axis=1).reshape(B, 1, L)
        tile, n_s = _choose_tile(total_lanes, sublanes, itemsize,
                                 budget_bytes, override=s_tile)
        blk_shape = (1, 1, tile)
        gate_spec = pl.BlockSpec(blk_shape, lambda b, s: (b, 0, s))
        out_shape2 = jax.ShapeDtypeStruct((B, 1, L), feats.dtype)

    # Deeper input pipelining only for short tiles (keeps VMEM headroom on v7x).
    n_in_bufs = 3 if tile <= 512 else 2
    if n_in_bufs > 2:
        feats_spec = pl.BlockSpec(blk_shape, lambda b, s: (b, 0, s),
                                  pipeline_mode=pl.Buffered(n_in_bufs))
    else:
        feats_spec = pl.BlockSpec(blk_shape, lambda b, s: (b, 0, s))
    out_spec = pl.BlockSpec(blk_shape, lambda b, s: (b, 0, s))

    blk_bytes = sublanes * tile * itemsize
    # input bufs + output double-buffer + (possibly streamed) gate + margin.
    vmem_limit = (n_in_bufs + 2 + 2) * blk_bytes + (4 << 20)
    vmem_limit = int(min(max(vmem_limit, 16 << 20), vmem_cap - (16 << 20)))

    cost = pl.CostEstimate(
        flops=int(B * C0 * HW),
        transcendentals=0,
        bytes_accessed=int(itemsize * 2 * B * C0 * HW
                           + gate_in.size * gate_in.dtype.itemsize),
    )

    gated = pl.pallas_call(
        _make_gate_mul_kernel(compute_dtype),
        out_shape=out_shape2,
        grid_spec=pltpu.PrefetchScalarGridSpec(
            num_scalar_prefetch=0,
            grid=(B, n_s),
            in_specs=[gate_spec, feats_spec],
            out_specs=out_spec,
        ),
        compiler_params=pltpu.CompilerParams(
            dimension_semantics=("parallel", "parallel"),
            vmem_limit_bytes=vmem_limit,
        ),
        cost_estimate=cost,
    )(gate_in, x)

    return attn, gated.reshape(B, C0, H, W)


# ----------------------------------------------------------------------------
# Reference + demo
# ----------------------------------------------------------------------------
def _reference(feats, label, w1, w2):
    h = jnp.maximum(label @ w1, 0.0)
    attn = h @ w2                                   # (B, C0)
    gate = 1.0 / (1.0 + jnp.exp(-attn))
    return attn, feats * gate[:, :, None, None]


if __name__ == "__main__":
    # label_attention(in_c=(C0, C1)): feats have C0 channels, label has C1 dims.
    B, C0, C1 = 2, 64, 32
    key = jax.random.PRNGKey(0)
    kf, kl, k1, k2 = jax.random.split(key, 4)
    label = jax.random.normal(kl, (B, C1), jnp.float32)
    # PyTorch Conv2d(1x1, bias=False) stores (out, in, 1, 1); keep transposed (in, out).
    s1 = 1.0 / (C1 ** 0.5)
    s2 = 1.0 / (C0 ** 0.5)
    w1 = jax.random.uniform(k1, (C1, C0), jnp.float32, -s1, s1)
    w2 = jax.random.uniform(k2, (C0, C0), jnp.float32, -s2, s2)

    # Case 1: HW >= 128 -> channel-sublane / spatial-lane streaming path.
    # s_tile=128 forces multiple spatial steps even at this small demo size,
    # exercising the fully-parallel grid and the Buffered(3) input pipeline.
    H = W = 16
    feats = jax.random.normal(kf, (B, C0, H, W), jnp.float32)
    ch_attn, gated = jax.block_until_ready(
        label_attention_pallas(feats, label, w1, w2, s_tile=128))
    ref_attn, ref_feats = _reference(feats, label, w1, w2)
    assert ch_attn.shape == (B, C0)
    assert gated.shape == (B, C0, H, W)
    assert jnp.allclose(ch_attn, ref_attn, atol=1e-4, rtol=1e-4)
    assert jnp.allclose(gated, ref_feats, atol=1e-4, rtol=1e-4)

    # Case 2: small map (HW < 128) -> lane-dense flattened path (no masked stores).
    H2 = W2 = 8
    feats2 = jax.random.normal(kf, (B, C0, H2, W2), jnp.float32)
    ch_attn2, gated2 = jax.block_until_ready(
        label_attention_pallas(feats2, label, w1, w2))
    ref_attn2, ref_feats2 = _reference(feats2, label, w1, w2)
    assert jnp.allclose(ch_attn2, ref_attn2, atol=1e-4, rtol=1e-4)
    assert jnp.allclose(gated2, ref_feats2, atol=1e-4, rtol=1e-4)

    print("KERNEL_OK")
</pallas_src>

<mosaic_0001>
module attributes {stable_mosaic.version = 11 : i64} {
  func.func @_attn_mlp_kernel(%arg0: memref<2x32xf32, #tpu.memory_space<vmem>>, %arg1: memref<32x64xf32, #tpu.memory_space<vmem>>, %arg2: memref<64x64xf32, #tpu.memory_space<vmem>>, %arg3: memref<2x64xf32, #tpu.memory_space<vmem>>, %arg4: memref<2x64xf32, #tpu.memory_space<vmem>>) attributes {dimension_semantics = [], scalar_prefetch = 0 : i64, scratch_operands = 0 : i64, tpu.core_type = #tpu.core_type<tc>} {
    %c0 = arith.constant 0 : index
    %c0_0 = arith.constant 0 : index
    %0 = vector.load %arg0[%c0, %c0_0] : memref<2x32xf32, #tpu.memory_space<vmem>>, vector<2x32xf32>
    %c0_1 = arith.constant 0 : index
    %c0_2 = arith.constant 0 : index
    %1 = vector.load %arg1[%c0_1, %c0_2] : memref<32x64xf32, #tpu.memory_space<vmem>>, vector<32x64xf32>
    %c0_3 = arith.constant 0 : index
    %c0_4 = arith.constant 0 : index
    %2 = vector.load %arg2[%c0_3, %c0_4] : memref<64x64xf32, #tpu.memory_space<vmem>>, vector<64x64xf32>
    %cst = arith.constant dense<0.000000e+00> : vector<2x64xf32>
    %3 = tpu.matmul %0, %1, %cst {dimension_numbers = #tpu.dot_dimension_numbers<[1], [0], [0], [1], [0, 0, 1, 1], [], []>} : vector<2x32xf32>, vector<32x64xf32>, vector<2x64xf32> -> vector<2x64xf32>
    %cst_5 = arith.constant 0.000000e+00 : f32
    %4 = vector.broadcast %cst_5 : f32 to vector<2x64xf32>
    %5 = arith.maximumf %3, %4 : vector<2x64xf32>
    %cst_6 = arith.constant dense<0.000000e+00> : vector<2x64xf32>
    %6 = tpu.matmul %5, %2, %cst_6 {dimension_numbers = #tpu.dot_dimension_numbers<[1], [0], [0], [1], [0, 0, 1, 1], [], []>} : vector<2x64xf32>, vector<64x64xf32>, vector<2x64xf32> -> vector<2x64xf32>
    %c0_7 = arith.constant 0 : index
    %c0_8 = arith.constant 0 : index
    %7 = vector.load %arg3[%c0_7, %c0_8] : memref<2x64xf32, #tpu.memory_space<vmem>>, vector<2x64xf32>
    tpu.vector_store %arg3[%c0_7, %c0_8], %6 {strides = array<i32>} : memref<2x64xf32, #tpu.memory_space<vmem>>, vector<2x64xf32>,
    %cst_9 = arith.constant 0.000000e+00 : f32
    %8 = vector.broadcast %cst_9 : f32 to vector<2x64xf32>
    %9 = arith.subf %8, %6 : vector<2x64xf32>
    %10 = math.exp %9 : vector<2x64xf32>
    %cst_10 = arith.constant 1.000000e+00 : f32
    %11 = vector.broadcast %cst_10 : f32 to vector<2x64xf32>
    %12 = arith.addf %11, %10 : vector<2x64xf32>
    %cst_11 = arith.constant 1.000000e+00 : f32
    %13 = vector.broadcast %cst_11 : f32 to vector<2x64xf32>
    %14 = arith.divf %13, %12 : vector<2x64xf32>
    %c0_12 = arith.constant 0 : index
    %c0_13 = arith.constant 0 : index
    %15 = vector.load %arg4[%c0_12, %c0_13] : memref<2x64xf32, #tpu.memory_space<vmem>>, vector<2x64xf32>
    tpu.vector_store %arg4[%c0_12, %c0_13], %14 {strides = array<i32>} : memref<2x64xf32, #tpu.memory_space<vmem>>, vector<2x64xf32>,
    return
  }
}

</mosaic_0001>

<llo_original>
// kernel: tpu_custom_call.1
$region0: #{tpu_custom_call.1}
  #allocation0 [shape = 'u32[]', space=smem, size = 0x4, offset = 0x4, fixed_abs, tag = 'smem constant byte address 0x4 - core index']
  #allocation1 [shape = 'u32[144,128]{1,0:T(1,128)}', space=vmem, size = 0x12000, scoped, tag = 'internal scratch']
  %s0 = inlined_call_operand.hbm [shape: f32[2,32], index: 0, kind: input, shape index: {}]
  %s1 = inlined_call_operand.hbm [shape: f32[32,64], index: 1, kind: input, shape index: {}]
  %s2 = inlined_call_operand.hbm [shape: f32[64,64], index: 2, kind: input, shape index: {}]
  %s3 = inlined_call_operand.hbm [shape: f32[2,64], index: 3, kind: output, shape index: {0}]
  %s4 = inlined_call_operand.hbm [shape: f32[2,64], index: 4, kind: output, shape index: {1}]
  %5 = xla_tuple %s3, %s4
  %s6 = sld [smem:[#allocation0]]
  $region42: #{tpu_custom_call.1} parent=0
    _
  %s8 = ssub.s32 1, %s6
  %s9 = scalar_select 0, %s8, %s6
  $region1: #{tpu_custom_call.1} parent=0
    #allocation2 [shape = 'u8[1024]{0}', space=vmem, size = 0x400, scoped, tag = 'input window, operand 0, single buffered']
    #allocation3 [shape = 's32[1]{0}', space=sflag, size = 0x4, scoped, tag = 'scoped memory for tpu_custom_call.1']
    #allocation4 [shape = 's32[1]{0}', space=sflag, size = 0x4, scoped, tag = 'scoped memory for tpu_custom_call.1']
    #allocation5 [shape = 'u8[16384]{0}', space=vmem, size = 0x4000, scoped, tag = 'input window, operand 1, single buffered']
    #allocation6 [shape = 's32[1]{0}', space=sflag, size = 0x4, scoped, tag = 'scoped memory for tpu_custom_call.1']
    #allocation7 [shape = 'u8[32768]{0}', space=vmem, size = 0x8000, scoped, tag = 'input window, operand 2, single buffered']
    #allocation8 [shape = 'u8[1024]{0}', space=vmem, size = 0x400, scoped, tag = 'output window, operand 0, single buffered']
    #allocation9 [shape = 'u8[1024]{0}', space=vmem, size = 0x400, scoped, tag = 'output window, operand 1, single buffered']
    #allocation10 [shape = 's32[1]{0}', space=sflag, size = 0x4, scoped, tag = 'scoped memory for tpu_custom_call.1']
    %10 = vsyncpa [#allocation3], 0
    %11 = vsyncpa [#allocation6], 0
    %12 = vsyncpa [#allocation4], 0
    %13 = vsyncpa [#allocation10], 0
    // Predicated region
    $region2: #{tpu_custom_call.1} parent=1 // pred_check
      _
    $region3: #{tpu_custom_call.1} parent=1 // pred_check_branch
      %15 = sbr.rel (0) target = $region5
    $region4: #{tpu_custom_call.1} parent=1 // pred_region
      %s17 = ssub.s32 32, 32
      %18 = vsyncadd [#allocation3], %s17
      %s20 = sshll.u32 [#allocation2], 4
      %s21 = int_to_ptr.vmem [resolvable:$true] %s20
      %23 = dma.hbm_to_vmem [thread:$0]  %s0, 32, %s21, [#allocation3]
    $region5: #{tpu_custom_call.1} parent=1 // pred_fallthru
      _
    // Predicated region
    $region6: #{tpu_custom_call.1} parent=1 // pred_check
      _
    $region7: #{tpu_custom_call.1} parent=1 // pred_check_branch
      %25 = sbr.rel (0) target = $region9
    $region8: #{tpu_custom_call.1} parent=1 // pred_region
      %s27 = ssub.s32 512, 512
      %28 = vsyncadd [#allocation6], %s27
      %s29 = sshll.u32 [#allocation5], 4
      %s30 = int_to_ptr.vmem [resolvable:$true] %s29
      %35 = dma.hbm_to_vmem [thread:$0]  %s1, 512, %s30, [#allocation6], 128, 128, 8
    $region9: #{tpu_custom_call.1} parent=1 // pred_fallthru
      _
    // Predicated region
    $region10: #{tpu_custom_call.1} parent=1 // pred_check
      _
    $region11: #{tpu_custom_call.1} parent=1 // pred_check_branch
      %37 = sbr.rel (0) target = $region13
    $region12: #{tpu_custom_call.1} parent=1 // pred_region
      %s39 = ssub.s32 1024, 1024
      %40 = vsyncadd [#allocation6], %s39
      %s41 = sshll.u32 [#allocation7], 4
      %s42 = int_to_ptr.vmem [resolvable:$true] %s41
      %47 = dma.hbm_to_vmem [thread:$0]  %s2, 1024, %s42, [#allocation6], 128, 128, 8
    $region13: #{tpu_custom_call.1} parent=1 // pred_fallthru
      _
    // Predicated region
    $region14: #{tpu_custom_call.1} parent=1 // pred_check
      _
    $region15: #{tpu_custom_call.1} parent=1 // pred_check_branch
      %49 = sbr.rel (0) target = $region17
    $region16: #{tpu_custom_call.1} parent=1 // pred_region
      %50 = dma.done [#allocation3], 32
    $region17: #{tpu_custom_call.1} parent=1 // pred_fallthru
      _
    // Predicated region
    $region18: #{tpu_custom_call.1} parent=1 // pred_check
      _
    $region19: #{tpu_custom_call.1} parent=1 // pred_check_branch
      %52 = sbr.rel (0) target = $region21
    $region20: #{tpu_custom_call.1} parent=1 // pred_region
      %53 = dma.done [#allocation6], 512
    $region21: #{tpu_custom_call.1} parent=1 // pred_fallthru
      _
    // Predicated region
    $region22: #{tpu_custom_call.1} parent=1 // pred_check
      _
    $region23: #{tpu_custom_call.1} parent=1 // pred_check_branch
      %55 = sbr.rel (0) target = $region25
    $region24: #{tpu_custom_call.1} parent=1 // pred_region
      %56 = dma.done [#allocation6], 1024
    $region25: #{tpu_custom_call.1} parent=1 // pred_fallthru
      _
    %v57 = vld [vmem:[#allocation2] sm:$0x3]
    %v58 = vld [vmem:[#allocation5] sm:$0xff]
    %v59 = vld [vmem:[#allocation5 + $0x8] sm:$0xff]
    %v60 = vld [vmem:[#allocation5 + $0x10] sm:$0xff]
    %v61 = vld [vmem:[#allocation5 + $0x18] sm:$0xff]
    %v62 = vld [vmem:[#allocation7] sm:$0xff]
    %v63 = vld [vmem:[#allocation7 + $0x8] sm:$0xff]
    %v64 = vld [vmem:[#allocation7 + $0x10] sm:$0xff]
    %v65 = vld [vmem:[#allocation7 + $0x18] sm:$0xff]
    %v66 = vld [vmem:[#allocation7 + $0x20] sm:$0xff]
    %v67 = vld [vmem:[#allocation7 + $0x28] sm:$0xff]
    %v68 = vld [vmem:[#allocation7 + $0x30] sm:$0xff]
    %v69 = vld [vmem:[#allocation7 + $0x38] sm:$0xff]
    %vm70 = vcmask 261120
    %v72 = vsel %vm70, %v57, 0
    %74 = vmatprep.subr.mxu0 0.0
    %75 = vmatpush1.msra.mxu0 %v58
    %76 = vmatprep.subr.mxu0 0.0
    %77 = vmatpush1.msra.mxu0 %v59
    %78 = vmatprep.subr.mxu0 0.0
    %79 = vmatpush1.msra.mxu0 %v60
    %80 = vmatprep.subr.mxu0 0.0
    %81 = vmatpush1.msra.mxu0 %v61
    %82 = vmatprep.subr.mxu0 0.0
    %83 = vmatpush1.msra.mxu0 0.0
    %84 = vmatprep.subr.mxu0 0.0
    %85 = vmatpush1.msra.mxu0 0.0
    %86 = vmatprep.subr.mxu0 0.0
    %87 = vmatpush1.msra.mxu0 0.0
    %88 = vmatprep.subr.mxu0 0.0
    %89 = vmatpush1.msra.mxu0 0.0
    %90 = vmatprep.subr.mxu0 0.0
    %91 = vmatpush1.msra.mxu0 0.0
    %92 = vmatprep.subr.mxu0 0.0
    %93 = vmatpush1.msra.mxu0 0.0
    %94 = vmatprep.subr.mxu0 0.0
    %95 = vmatpush1.msra.mxu0 0.0
    %96 = vmatprep.subr.mxu0 0.0
    %97 = vmatpush1.msra.mxu0 0.0
    %98 = vmatprep.subr.mxu0 0.0
    %99 = vmatpush1.msra.mxu0 0.0
    %100 = vmatprep.subr.mxu0 0.0
    %101 = vmatpush1.msra.mxu0 0.0
    %102 = vmatprep.subr.mxu0 0.0
    %103 = vmatpush1.msra.mxu0 0.0
    %104 = vmatprep.subr.mxu0 0.0
    %105 = vmatpush1.msra.mxu0 0.0
    %106 = vmatprep.subr.mxu0 0.0
    %107 = vmatpush1.msra.mxu0 0.0
    %108 = vmatprep.subr.mxu0 0.0
    %109 = vmatpush1.msra.mxu0 0.0
    %110 = vmatprep.subr.mxu0 0.0
    %111 = vmatpush1.msra.mxu0 0.0
    %112 = vmatprep.subr.mxu0 0.0
    %113 = vmatpush1.msra.mxu0 0.0
    %114 = vmatprep.subr.mxu0 0.0
    %115 = vmatpush1.msra.mxu0 0.0
    %116 = vmatprep.subr.mxu0 0.0
    %117 = vmatpush1.msra.mxu0 0.0
    %118 = vmatprep.subr.mxu0 0.0
    %119 = vmatpush1.msra.mxu0 0.0
    %120 = vmatprep.subr.mxu0 0.0
    %121 = vmatpush1.msra.mxu0 0.0
    %122 = vmatprep.subr.mxu0 0.0
    %123 = vmatpush1.msra.mxu0 0.0
    %124 = vmatprep.subr.mxu0 0.0
    %125 = vmatpush1.msra.mxu0 0.0
    %126 = vmatprep.subr.mxu0 0.0
    %127 = vmatpush1.msra.mxu0 0.0
    %128 = vmatprep.subr.mxu0 0.0
    %129 = vmatpush1.msra.mxu0 0.0
    %130 = vmatprep.subr.mxu0 0.0
    %131 = vmatpush1.msra.mxu0 0.0
    %132 = vmatprep.subr.mxu0 0.0
    %133 = vmatpush1.msra.mxu0 0.0
    %134 = vmatprep.subr.mxu0 0.0
    %135 = vmatpush1.msra.mxu0 0.0
    %136 = vmatprep.subr.mxu0 0.0
    %137 = vmatpush1.msra.mxu0 0.0
    %138 = vmatprep.mubr.f32.mxu0 0.0
    %139 = vmatmul.mubr.f32.gmra.mrb[0].mxu0 %v72
    %v140 = vpop.f32.mrb[0].mxu0
    %v141 = vadd.f32 0.0, %v140
    %v142 = vpop.f32.mrb[0].mxu0
    %143 = vdwg.mxu0
    %v144 = vmax.f32 %v141, 0.0
    %vm145 = vcmask 523264
    %v147 = vsel %vm145, %v144, 0
    %149 = vmatprep.subr.mxu0 0.0
    %150 = vmatpush1.msra.mxu0 %v62
    %151 = vmatprep.subr.mxu0 0.0
    %152 = vmatpush1.msra.mxu0 %v63
    %153 = vmatprep.subr.mxu0 0.0
    %154 = vmatpush1.msra.mxu0 %v64
    %155 = vmatprep.subr.mxu0 0.0
    %156 = vmatpush1.msra.mxu0 %v65
    %157 = vmatprep.subr.mxu0 0.0
    %158 = vmatpush1.msra.mxu0 %v66
    %159 = vmatprep.subr.mxu0 0.0
    %160 = vmatpush1.msra.mxu0 %v67
    %161 = vmatprep.subr.mxu0 0.0
    %162 = vmatpush1.msra.mxu0 %v68
    %163 = vmatprep.subr.mxu0 0.0
    %164 = vmatpush1.msra.mxu0 %v69
    %165 = vmatprep.subr.mxu0 0.0
    %166 = vmatpush1.msra.mxu0 0.0
    %167 = vmatprep.subr.mxu0 0.0
    %168 = vmatpush1.msra.mxu0 0.0
    %169 = vmatprep.subr.mxu0 0.0
    %170 = vmatpush1.msra.mxu0 0.0
    %171 = vmatprep.subr.mxu0 0.0
    %172 = vmatpush1.msra.mxu0 0.0
    %173 = vmatprep.subr.mxu0 0.0
    %174 = vmatpush1.msra.mxu0 0.0
    %175 = vmatprep.subr.mxu0 0.0
    %176 = vmatpush1.msra.mxu0 0.0
    %177 = vmatprep.subr.mxu0 0.0
    %178 = vmatpush1.msra.mxu0 0.0
    %179 = vmatprep.subr.mxu0 0.0
    %180 = vmatpush1.msra.mxu0 0.0
    %181 = vmatprep.subr.mxu0 0.0
    %182 = vmatpush1.msra.mxu0 0.0
    %183 = vmatprep.subr.mxu0 0.0
    %184 = vmatpush1.msra.mxu0 0.0
    %185 = vmatprep.subr.mxu0 0.0
    %186 = vmatpush1.msra.mxu0 0.0
    %187 = vmatprep.subr.mxu0 0.0
    %188 = vmatpush1.msra.mxu0 0.0
    %189 = vmatprep.subr.mxu0 0.0
    %190 = vmatpush1.msra.mxu0 0.0
    %191 = vmatprep.subr.mxu0 0.0
    %192 = vmatpush1.msra.mxu0 0.0
    %193 = vmatprep.subr.mxu0 0.0
    %194 = vmatpush1.msra.mxu0 0.0
    %195 = vmatprep.subr.mxu0 0.0
    %196 = vmatpush1.msra.mxu0 0.0
    %197 = vmatprep.subr.mxu0 0.0
    %198 = vmatpush1.msra.mxu0 0.0
    %199 = vmatprep.subr.mxu0 0.0
    %200 = vmatpush1.msra.mxu0 0.0
    %201 = vmatprep.subr.mxu0 0.0
    %202 = vmatpush1.msra.mxu0 0.0
    %203 = vmatprep.subr.mxu0 0.0
    %204 = vmatpush1.msra.mxu0 0.0
    %205 = vmatprep.subr.mxu0 0.0
    %206 = vmatpush1.msra.mxu0 0.0
    %207 = vmatprep.subr.mxu0 0.0
    %208 = vmatpush1.msra.mxu0 0.0
    %209 = vmatprep.subr.mxu0 0.0
    %210 = vmatpush1.msra.mxu0 0.0
    %211 = vmatprep.subr.mxu0 0.0
    %212 = vmatpush1.msra.mxu0 0.0
    %213 = vmatprep.mubr.f32.mxu0 0.0
    %214 = vmatmul.mubr.f32.gmra.mrb[0].mxu0 %v147
    %v215 = vpop.f32.mrb[0].mxu0
    %v216 = vadd.f32 0.0, %v215
    %v217 = vpop.f32.mrb[0].mxu0
    %218 = vdwg.mxu0
    %vm219 = vcmask 517120
    %220 = vst.msk [vmem:[#allocation8] sm:$0x3] %vm219, %v216
    %v221 = vsub.f32 0.0, %v216
    %v222 = vmul.f32 %v221, 1.442695
    %v223 = vpow.pop %v222
    %v224 = vadd.f32 %v223, 1.0
    %v225 = vrcp.pop %v224
    %v226 = vmul.f32 1.0, %v225
    %227 = vst.msk [vmem:[#allocation9] sm:$0x3] %vm219, %v226
    // Predicated region
    $region26: #{tpu_custom_call.1} parent=1 // pred_check
      _
    $region27: #{tpu_custom_call.1} parent=1 // pred_check_branch
      %229 = sbr.rel (0) target = $region29
    $region28: #{tpu_custom_call.1} parent=1 // pred_region
      %s231 = ssub.s32 32, 32
      %232 = vsyncadd [#allocation4], %s231
      %s234 = sshll.u32 [#allocation8], 4
      %s235 = int_to_ptr.vmem [resolvable:$true] %s234
      %237 = dma.vmem_to_hbm [thread:$0]  %s235, 32, %s3, [#allocation4]
    $region29: #{tpu_custom_call.1} parent=1 // pred_fallthru
      _
    // Predicated region
    $region30: #{tpu_custom_call.1} parent=1 // pred_check
      _
    $region31: #{tpu_custom_call.1} parent=1 // pred_check_branch
      %239 = sbr.rel (0) target = $region33
    $region32: #{tpu_custom_call.1} parent=1 // pred_region
      %s241 = ssub.s32 32, 32
      %242 = vsyncadd [#allocation10], %s241
      %s244 = sshll.u32 [#allocation9], 4
      %s245 = int_to_ptr.vmem [resolvable:$true] %s244
      %247 = dma.vmem_to_hbm [thread:$0]  %s245, 32, %s4, [#allocation10]
    $region33: #{tpu_custom_call.1} parent=1 // pred_fallthru
      _
    // Predicated region
    $region34: #{tpu_custom_call.1} parent=1 // pred_check
      _
    $region35: #{tpu_custom_call.1} parent=1 // pred_check_branch
      %249 = sbr.rel (0) target = $region37
    $region36: #{tpu_custom_call.1} parent=1 // pred_region
      %250 = dma.done [#allocation4], 32
    $region37: #{tpu_custom_call.1} parent=1 // pred_fallthru
      _
    // Predicated region
    $region38: #{tpu_custom_call.1} parent=1 // pred_check
      _
    $region39: #{tpu_custom_call.1} parent=1 // pred_check_branch
      %252 = sbr.rel (0) target = $region41
    $region40: #{tpu_custom_call.1} parent=1 // pred_region
      %253 = dma.done [#allocation10], 32
    $region41: #{tpu_custom_call.1} parent=1 // pred_fallthru
      _
    %254 = vsyncpa [#allocation3], 1
    %255 = vsyncpa [#allocation6], 1
    %256 = vsyncpa [#allocation4], 1
    %257 = vsyncpa [#allocation10], 1

</llo_original>
